<compile_context>
chip_gen: v6e
topology: v6e:2x2x1
jax: 0.10.0
libtpu: 0.0.40
codegen_flags: <defaults>
</compile_context>

<pallas_src>
import math

import jax
import jax.numpy as jnp
from jax.experimental import pallas as pl
from jax.experimental.pallas import tpu as pltpu

_MIB = 1024 * 1024


def _get_pad(size: int, multiple: int):
    new_size = math.ceil(size / multiple) * multiple
    pad = new_size - size
    left = pad // 2
    return left, pad - left


def _padded_tile_bytes(rows: int, cols: int, dtype) -> int:
    """VMEM bytes of one (rows, cols) slice after (sublane, 128) layout tiling."""
    itemsize = jnp.dtype(dtype).itemsize
    sublane = max(8, 32 // itemsize)  # 8 for 4-byte, 16 for 2-byte, 32 for 1-byte
    return (pl.cdiv(rows, sublane) * sublane) * (pl.cdiv(cols, 128) * 128) * itemsize


def _vmem_plan():
    """Per-generation budget for the double-buffered in+out working set."""
    try:
        kind = jax.devices()[0].device_kind.lower()
    except Exception:  # pragma: no cover
        kind = ""
    if "v7" in kind:
        # 64 MiB physical / 32 MiB default scoped VMEM per TC, 2 TCs per chip.
        return dict(budget=26 * _MIB, default_scoped=32 * _MIB,
                    hard_cap=48 * _MIB, two_core=True)
    if "v6" in kind:
        # 128 MiB physical, 32 MiB default scoped, ~1.4 TB/s HBM -> big tiles.
        return dict(budget=48 * _MIB, default_scoped=32 * _MIB,
                    hard_cap=100 * _MIB, two_core=False)
    # v5e / unknown: 16 MiB default scoped VMEM, ~0.8 TB/s HBM.
    return dict(budget=12 * _MIB, default_scoped=16 * _MIB,
                hard_cap=100 * _MIB, two_core=False)


def _choose_channel_block(NC: int, cb_cap: int, two_core: bool) -> int:
    """How many collapsed (N*C) channels one grid step processes."""
    cb_cap = max(1, min(NC, cb_cap))
    if two_core and NC >= 2:
        # Keep >= 2 grid steps so both v7x TensorCores get work.
        cb_cap = min(cb_cap, pl.cdiv(NC, 2))
    # Prefer a block size dividing NC (no partial trailing block -> no DMA of
    # out-of-bounds rows that are then dropped); on v7x also prefer an even
    # number of blocks so the two cores stay balanced.
    best_div, best_even = 1, 0
    for d in range(1, cb_cap + 1):
        if NC % d == 0:
            best_div = d
            if (NC // d) % 2 == 0:
                best_even = d
    chosen = best_div
    if two_core and best_even and best_even * 2 >= best_div:
        chosen = best_even
    # If divisibility would shrink the tile a lot (e.g. NC prime), a partial
    # trailing block is cheaper than many tiny steps (~0.35 us fixed each).
    if chosen * 4 < cb_cap:
        chosen = cb_cap
    return chosen


def _make_kernel(cb, H, W, Hp, Wp, pad_top, pad_bot, pad_left, pad_right, merge_w):
    def kernel(x_ref, o_ref):
        # x_ref: (cb, H, W)   o_ref: (cb, Hp, Wp)
        # Top / bottom zero bands: full-width dense stores.
        if pad_top:
            o_ref[:, :pad_top, :] = jnp.zeros((cb, pad_top, Wp), o_ref.dtype)
        if pad_bot:
            o_ref[:, pad_top + H:, :] = jnp.zeros((cb, pad_bot, Wp), o_ref.dtype)
        if merge_w and (pad_left or pad_right):
            # Build the W-padded rows in registers (lane shift on the XLU) and
            # issue a single full-width store for the middle band.
            parts = []
            if pad_left:
                parts.append(jnp.zeros((cb, H, pad_left), o_ref.dtype))
            parts.append(x_ref[...])
            if pad_right:
                parts.append(jnp.zeros((cb, H, pad_right), o_ref.dtype))
            o_ref[:, pad_top:pad_top + H, :] = jnp.concatenate(parts, axis=-1)
        else:
            # Fallback / no-W-padding path: masked strip stores + interior.
            if pad_left:
                o_ref[:, pad_top:pad_top + H, :pad_left] = jnp.zeros(
                    (cb, H, pad_left), o_ref.dtype)
            if pad_right:
                o_ref[:, pad_top:pad_top + H, pad_left + W:] = jnp.zeros(
                    (cb, H, pad_right), o_ref.dtype)
            o_ref[:, pad_top:pad_top + H, pad_left:pad_left + W] = x_ref[...]
    return kernel


def center_padding(x: jax.Array, multiple: int) -> jax.Array:
    """Pallas implementation of CenterPadding.forward for a 4-D NCHW tensor."""
    assert x.ndim == 4, "center_padding expects NCHW input"
    N, C, H, W = x.shape
    pad_top, pad_bot = _get_pad(H, multiple)
    pad_left, pad_right = _get_pad(W, multiple)

    # Fast path: nothing to pad -> no kernel launch, no HBM round trip.
    if pad_top == pad_bot == pad_left == pad_right == 0:
        return x

    Hp = H + pad_top + pad_bot
    Wp = W + pad_left + pad_right

    # Collapse (N, C): one grid step processes a multi-channel slab
    # (few, large DMAs instead of N*C tiny ones).
    NC = N * C
    x2 = x.reshape(NC, H, W)

    plan = _vmem_plan()
    # Real (padded) VMEM cost per channel: x2 for the double-buffered input and
    # output, + ~1 output-sized slot of headroom for the row-band temporary.
    in_ch = _padded_tile_bytes(H, W, x.dtype)
    out_ch = _padded_tile_bytes(Hp, Wp, x.dtype)
    per_channel = 2 * in_ch + 3 * out_ch
    cb_cap = max(1, plan["budget"] // per_channel)
    cb = _choose_channel_block(NC, cb_cap, plan["two_core"])
    num_blocks = pl.cdiv(NC, cb)

    # Only override the scoped-VMEM limit when the padded working set needs it;
    # stay well below physical VMEM (64 MiB on v7x, 128 MiB on v5e/v6e).
    footprint = per_channel * cb + 2 * _MIB  # margin for internal scratch
    vmem_limit = None
    if footprint > plan["default_scoped"]:
        vmem_limit = min(plan["hard_cap"], footprint)
    # TODO(synk): truly huge single-channel images (footprint > hard_cap even at
    # cb=1) would also need H-tiling; not needed for dinov2-scale shapes.

    itemsize = jnp.dtype(x.dtype).itemsize
    in_bytes = NC * H * W * itemsize
    out_bytes = NC * Hp * Wp * itemsize

    def _run(merge_w):
        kernel = _make_kernel(cb, H, W, Hp, Wp,
                              pad_top, pad_bot, pad_left, pad_right, merge_w)
        return pl.pallas_call(
            kernel,
            out_shape=jax.ShapeDtypeStruct((NC, Hp, Wp), x.dtype),
            grid_spec=pltpu.PrefetchScalarGridSpec(
                num_scalar_prefetch=0,
                grid=(num_blocks,),
                # Last two dims equal the full array dims, so the (8,128) block
                # constraint is satisfied regardless of H/W values.
                in_specs=[pl.BlockSpec((cb, H, W), lambda i: (i, 0, 0))],
                out_specs=pl.BlockSpec((cb, Hp, Wp), lambda i: (i, 0, 0)),
            ),
            compiler_params=pltpu.CompilerParams(
                dimension_semantics=("parallel",),
                vmem_limit_bytes=vmem_limit,
            ),
            cost_estimate=pl.CostEstimate(
                flops=0, transcendentals=0, bytes_accessed=in_bytes + out_bytes
            ),
        )(x2)

    try:
        out = _run(True)
    except Exception:
        # Compatibility fallback: if this Mosaic toolchain rejects the
        # unaligned lane-dim concatenate, use per-strip masked stores
        # (identical semantics, the previous proven-good codegen).
        out = _run(False)
    return out.reshape(N, C, Hp, Wp)


def _ref_pad(x, multiple):
    pt, pb = _get_pad(x.shape[2], multiple)
    wl, wr = _get_pad(x.shape[3], multiple)
    return jnp.pad(x, ((0, 0), (0, 0), (pt, pb), (wl, wr)))


if __name__ == "__main__":
    keys = jax.random.split(jax.random.PRNGKey(0), 4)

    # 1) Main case: spatial dims NOT multiples of 8, so padding is exercised.
    multiple = 8
    x = jax.random.normal(keys[0], (2, 4, 13, 10), dtype=jnp.float32)
    out = jax.block_until_ready(center_padding(x, multiple))
    ref = _ref_pad(x, multiple)
    assert out.shape == ref.shape, (out.shape, ref.shape)
    assert out.dtype == ref.dtype
    assert jnp.array_equal(out, ref), "mismatch vs reference padding (case 1)"

    # 2) Small odd N*C and larger asymmetric padding.
    x_pb = jax.random.normal(keys[1], (1, 3, 37, 29), dtype=jnp.float32)
    out_pb = jax.block_until_ready(center_padding(x_pb, 14))
    ref_pb = _ref_pad(x_pb, 14)
    assert out_pb.shape == ref_pb.shape
    assert jnp.array_equal(out_pb, ref_pb), "mismatch vs reference padding (case 2)"

    # 3) bf16 exercises the 16-row sublane packing in the footprint math.
    x_bf = jax.random.normal(keys[2], (2, 8, 13, 10), dtype=jnp.bfloat16)
    out_bf = jax.block_until_ready(center_padding(x_bf, multiple))
    assert jnp.array_equal(out_bf, _ref_pad(x_bf, multiple)), "mismatch (case 3)"

    # 4) Already-aligned input: fast path, no kernel launch.
    x_al = jax.random.normal(keys[3], (2, 4, 16, 16), dtype=jnp.float32)
    out_al = jax.block_until_ready(center_padding(x_al, multiple))
    assert out_al is x_al
    assert jnp.array_equal(out_al, _ref_pad(x_al, multiple))

    print("KERNEL_OK")
</pallas_src>

<mosaic_0001>
module attributes {stable_mosaic.version = 11 : i64} {
  func.func @kernel(%arg0: i32, %arg1: memref<8x13x10xf32, #tpu.memory_space<vmem>>, %arg2: memref<8x16x16xf32, #tpu.memory_space<vmem>>) attributes {dimension_semantics = [#tpu.dimension_semantics<parallel>], iteration_bounds = array<i64: 1>, scalar_prefetch = 0 : i64, scratch_operands = 0 : i64, tpu.core_type = #tpu.core_type<tc>, window_params = [{transform_indices = @transform_0, window_bounds = array<i64: 8, 13, 10>}, {transform_indices = @transform_1, window_bounds = array<i64: 8, 16, 16>}]} {
    %cst = arith.constant 0.000000e+00 : f32
    %0 = vector.broadcast %cst : f32 to vector<8x1x16xf32>
    %c0 = arith.constant 0 : index
    %c0_0 = arith.constant 0 : index
    %c0_1 = arith.constant 0 : index
    %1 = vector.load %arg2[%c0, %c0_0, %c0_1] : memref<8x16x16xf32, #tpu.memory_space<vmem>>, vector<8x1x16xf32>
    tpu.vector_store %arg2[%c0, %c0_0, %c0_1], %0 {strides = array<i32>} : memref<8x16x16xf32, #tpu.memory_space<vmem>>, vector<8x1x16xf32>,
    %cst_2 = arith.constant 0.000000e+00 : f32
    %2 = vector.broadcast %cst_2 : f32 to vector<8x2x16xf32>
    %c0_3 = arith.constant 0 : index
    %c14 = arith.constant 14 : index
    %c0_4 = arith.constant 0 : index
    %3 = vector.load %arg2[%c0_3, %c14, %c0_4] : memref<8x16x16xf32, #tpu.memory_space<vmem>>, vector<8x2x16xf32>
    tpu.vector_store %arg2[%c0_3, %c14, %c0_4], %2 {strides = array<i32>} : memref<8x16x16xf32, #tpu.memory_space<vmem>>, vector<8x2x16xf32>,
    %cst_5 = arith.constant 0.000000e+00 : f32
    %4 = vector.broadcast %cst_5 : f32 to vector<8x13x3xf32>
    %c0_6 = arith.constant 0 : index
    %c0_7 = arith.constant 0 : index
    %c0_8 = arith.constant 0 : index
    %5 = vector.load %arg1[%c0_6, %c0_7, %c0_8] : memref<8x13x10xf32, #tpu.memory_space<vmem>>, vector<8x13x10xf32>
    %cst_9 = arith.constant 0.000000e+00 : f32
    %6 = vector.broadcast %cst_9 : f32 to vector<8x13x3xf32>
    %7 = tpu.concatenate %4, %5, %6 in 2 : vector<8x13x3xf32>, vector<8x13x10xf32>, vector<8x13x3xf32> -> vector<8x13x16xf32>
    %c0_10 = arith.constant 0 : index
    %c1 = arith.constant 1 : index
    %c0_11 = arith.constant 0 : index
    %8 = vector.load %arg2[%c0_10, %c1, %c0_11] : memref<8x16x16xf32, #tpu.memory_space<vmem>>, vector<8x13x16xf32>
    tpu.vector_store %arg2[%c0_10, %c1, %c0_11], %7 {strides = array<i32>} : memref<8x16x16xf32, #tpu.memory_space<vmem>>, vector<8x13x16xf32>,
    return
  }
  func.func @transform_0(%arg0: i32) -> (i32, i32, i32) {
    %c0_i32 = arith.constant 0 : i32
    %c0_i32_0 = arith.constant 0 : i32
    %c0_i32_1 = arith.constant 0 : i32
    return %arg0, %c0_i32, %c0_i32_0 : i32, i32, i32
  }
  func.func @transform_1(%arg0: i32) -> (i32, i32, i32) {
    %c0_i32 = arith.constant 0 : i32
    %c0_i32_0 = arith.constant 0 : i32
    %c0_i32_1 = arith.constant 0 : i32
    return %arg0, %c0_i32, %c0_i32_0 : i32, i32, i32
  }
}

module attributes {stable_mosaic.version = 11 : i64} {
  func.func @kernel(%arg0: i32, %arg1: memref<8x13x10xf32, #tpu.memory_space<vmem>>, %arg2: memref<8x16x16xf32, #tpu.memory_space<vmem>>) attributes {dimension_semantics = [#tpu.dimension_semantics<parallel>], iteration_bounds = array<i64: 1>, scalar_prefetch = 0 : i64, scratch_operands = 0 : i64, tpu.core_type = #tpu.core_type<tc>, window_params = [{transform_indices = @transform_0, window_bounds = array<i64: 8, 13, 10>}, {transform_indices = @transform_1, window_bounds = array<i64: 8, 16, 16>}]} {
    %cst = arith.constant 0.000000e+00 : f32
    %0 = vector.broadcast %cst : f32 to vector<8x1x16xf32>
    %c0 = arith.constant 0 : index
    %c0_0 = arith.constant 0 : index
    %c0_1 = arith.constant 0 : index
    %1 = vector.load %arg2[%c0, %c0_0, %c0_1] : memref<8x16x16xf32, #tpu.memory_space<vmem>>, vector<8x1x16xf32>
    tpu.vector_store %arg2[%c0, %c0_0, %c0_1], %0 {strides = array<i32>} : memref<8x16x16xf32, #tpu.memory_space<vmem>>, vector<8x1x16xf32>,
    %cst_2 = arith.constant 0.000000e+00 : f32
    %2 = vector.broadcast %cst_2 : f32 to vector<8x2x16xf32>
    %c0_3 = arith.constant 0 : index
    %c14 = arith.constant 14 : index
    %c0_4 = arith.constant 0 : index
    %3 = vector.load %arg2[%c0_3, %c14, %c0_4] : memref<8x16x16xf32, #tpu.memory_space<vmem>>, vector<8x2x16xf32>
    tpu.vector_store %arg2[%c0_3, %c14, %c0_4], %2 {strides = array<i32>} : memref<8x16x16xf32, #tpu.memory_space<vmem>>, vector<8x2x16xf32>,
    %cst_5 = arith.constant 0.000000e+00 : f32
    %4 = vector.broadcast %cst_5 : f32 to vector<8x13x3xf32>
    %c0_6 = arith.constant 0 : index
    %c1 = arith.constant 1 : index
    %c0_7 = arith.constant 0 : index
    %5 = vector.load %arg2[%c0_6, %c1, %c0_7] : memref<8x16x16xf32, #tpu.memory_space<vmem>>, vector<8x13x3xf32>
    tpu.vector_store %arg2[%c0_6, %c1, %c0_7], %4 {strides = array<i32>} : memref<8x16x16xf32, #tpu.memory_space<vmem>>, vector<8x13x3xf32>,
    %cst_8 = arith.constant 0.000000e+00 : f32
    %6 = vector.broadcast %cst_8 : f32 to vector<8x13x3xf32>
    %c0_9 = arith.constant 0 : index
    %c1_10 = arith.constant 1 : index
    %c13 = arith.constant 13 : index
    %7 = vector.load %arg2[%c0_9, %c1_10, %c13] : memref<8x16x16xf32, #tpu.memory_space<vmem>>, vector<8x13x3xf32>
    tpu.vector_store %arg2[%c0_9, %c1_10, %c13], %6 {strides = array<i32>} : memref<8x16x16xf32, #tpu.memory_space<vmem>>, vector<8x13x3xf32>,
    %c0_11 = arith.constant 0 : index
    %c0_12 = arith.constant 0 : index
    %c0_13 = arith.constant 0 : index
    %8 = vector.load %arg1[%c0_11, %c0_12, %c0_13] : memref<8x13x10xf32, #tpu.memory_space<vmem>>, vector<8x13x10xf32>
    %c0_14 = arith.constant 0 : index
    %c1_15 = arith.constant 1 : index
    %c3 = arith.constant 3 : index
    %9 = vector.load %arg2[%c0_14, %c1_15, %c3] : memref<8x16x16xf32, #tpu.memory_space<vmem>>, vector<8x13x10xf32>
    tpu.vector_store %arg2[%c0_14, %c1_15, %c3], %8 {strides = array<i32>} : memref<8x16x16xf32, #tpu.memory_space<vmem>>, vector<8x13x10xf32>,
    return
  }
  func.func @transform_0(%arg0: i32) -> (i32, i32, i32) {
    %c0_i32 = arith.constant 0 : i32
    %c0_i32_0 = arith.constant 0 : i32
    %c0_i32_1 = arith.constant 0 : i32
    return %arg0, %c0_i32, %c0_i32_0 : i32, i32, i32
  }
  func.func @transform_1(%arg0: i32) -> (i32, i32, i32) {
    %c0_i32 = arith.constant 0 : i32
    %c0_i32_0 = arith.constant 0 : i32
    %c0_i32_1 = arith.constant 0 : i32
    return %arg0, %c0_i32, %c0_i32_0 : i32, i32, i32
  }
}

</mosaic_0001>

<llo_original>
// kernel: tpu_custom_call.1
$region0: #{tpu_custom_call.1}
  #allocation0 [shape = 'u32[]', space=smem, size = 0x4, offset = 0x4, fixed_abs, tag = 'smem constant byte address 0x4 - core index']
  #allocation1 [shape = 'u32[144,128]{1,0:T(1,128)}', space=vmem, size = 0x12000, scoped, tag = 'internal scratch']
  %s0 = inlined_call_operand.vmem [shape: f32[8,13,10], index: 0, kind: input, shape index: {}]
  %s1 = inlined_call_operand.hbm [shape: f32[8,16,16], index: 1, kind: output, shape index: {}]
  %s2 = sld [smem:[#allocation0]]
  $region14: #{tpu_custom_call.1} parent=0
    _
  %s4 = ssub.s32 1, %s2
  %s5 = scalar_select 0, %s4, %s2
  $region1: #{tpu_custom_call.1} parent=0
    #allocation2 [shape = 'u8[65536]{0}', space=vmem, size = 0x10000, scoped, tag = 'output window, operand 0, single buffered']
    #allocation3 [shape = 's32[1]{0}', space=sflag, size = 0x4, scoped, tag = 'scoped memory for tpu_custom_call.1']
    %6 = vsyncpa [#allocation3], 0
    // Predicated region
    $region2: #{tpu_custom_call.1} parent=1 // pred_check
      _
    $region3: #{tpu_custom_call.1} parent=1 // pred_check_branch
      %8 = sbr.rel (0) target = $region5
    $region4: #{tpu_custom_call.1} parent=1 // pred_region
      _
    $region5: #{tpu_custom_call.1} parent=1 // pred_fallthru
      _
    %vm9 = vcmask 122880
    %10 = vst.msk [vmem:[#allocation2] sm:$0x1] %vm9, 0.0
    %11 = vst.msk [vmem:[#allocation2 + $0x10] sm:$0x1] %vm9, 0.0
    %12 = vst.msk [vmem:[#allocation2 + $0x20] sm:$0x1] %vm9, 0.0
    %13 = vst.msk [vmem:[#allocation2 + $0x30] sm:$0x1] %vm9, 0.0
    %14 = vst.msk [vmem:[#allocation2 + $0x40] sm:$0x1] %vm9, 0.0
    %15 = vst.msk [vmem:[#allocation2 + $0x50] sm:$0x1] %vm9, 0.0
    %16 = vst.msk [vmem:[#allocation2 + $0x60] sm:$0x1] %vm9, 0.0
    %17 = vst.msk [vmem:[#allocation2 + $0x70] sm:$0x1] %vm9, 0.0
    %vm18 = vcmask 123904
    %19 = vst.msk [vmem:[#allocation2 + $0xe] sm:$0x3] %vm18, 0.0
    %20 = vst.msk [vmem:[#allocation2 + $0x1e] sm:$0x3] %vm18, 0.0
    %21 = vst.msk [vmem:[#allocation2 + $0x2e] sm:$0x3] %vm18, 0.0
    %22 = vst.msk [vmem:[#allocation2 + $0x3e] sm:$0x3] %vm18, 0.0
    %23 = vst.msk [vmem:[#allocation2 + $0x4e] sm:$0x3] %vm18, 0.0
    %24 = vst.msk [vmem:[#allocation2 + $0x5e] sm:$0x3] %vm18, 0.0
    %25 = vst.msk [vmem:[#allocation2 + $0x6e] sm:$0x3] %vm18, 0.0
    %26 = vst.msk [vmem:[#allocation2 + $0x7e] sm:$0x3] %vm18, 0.0
    %v27 = vld [vmem:[%s0] sm:$0xff]
    %v28 = vld [vmem:[%s0 + $0x8] sm:$0x1f]
    %v29 = vld [vmem:[%s0 + $0x10] sm:$0xff]
    %v30 = vld [vmem:[%s0 + $0x18] sm:$0x1f]
    %v31 = vld [vmem:[%s0 + $0x20] sm:$0xff]
    %v32 = vld [vmem:[%s0 + $0x28] sm:$0x1f]
    %v33 = vld [vmem:[%s0 + $0x30] sm:$0xff]
    %v34 = vld [vmem:[%s0 + $0x38] sm:$0x1f]
    %v35 = vld [vmem:[%s0 + $0x40] sm:$0xff]
    %v36 = vld [vmem:[%s0 + $0x48] sm:$0x1f]
    %v37 = vld [vmem:[%s0 + $0x50] sm:$0xff]
    %v38 = vld [vmem:[%s0 + $0x58] sm:$0x1f]
    %v39 = vld [vmem:[%s0 + $0x60] sm:$0xff]
    %v40 = vld [vmem:[%s0 + $0x68] sm:$0x1f]
    %v41 = vld [vmem:[%s0 + $0x70] sm:$0xff]
    %v42 = vld [vmem:[%s0 + $0x78] sm:$0x1f]
    %59 = vrot.lane.b32.xlu0 %v27, 3
    %v60 = vpop.permute.xlu0 %59
    %61 = vrot.lane.b32.xlu0 %v28, 3
    %v62 = vpop.permute.xlu0 %61
    %63 = vrot.lane.b32.xlu0 %v29, 3
    %v64 = vpop.permute.xlu0 %63
    %65 = vrot.lane.b32.xlu0 %v30, 3
    %v66 = vpop.permute.xlu0 %65
    %67 = vrot.lane.b32.xlu0 %v31, 3
    %v68 = vpop.permute.xlu0 %67
    %69 = vrot.lane.b32.xlu0 %v32, 3
    %v70 = vpop.permute.xlu0 %69
    %71 = vrot.lane.b32.xlu0 %v33, 3
    %v72 = vpop.permute.xlu0 %71
    %73 = vrot.lane.b32.xlu0 %v34, 3
    %v74 = vpop.permute.xlu0 %73
    %75 = vrot.lane.b32.xlu0 %v35, 3
    %v76 = vpop.permute.xlu0 %75
    %77 = vrot.lane.b32.xlu0 %v36, 3
    %v78 = vpop.permute.xlu0 %77
    %79 = vrot.lane.b32.xlu0 %v37, 3
    %v80 = vpop.permute.xlu0 %79
    %81 = vrot.lane.b32.xlu0 %v38, 3
    %v82 = vpop.permute.xlu0 %81
    %83 = vrot.lane.b32.xlu0 %v39, 3
    %v84 = vpop.permute.xlu0 %83
    %85 = vrot.lane.b32.xlu0 %v40, 3
    %v86 = vpop.permute.xlu0 %85
    %87 = vrot.lane.b32.xlu0 %v41, 3
    %v88 = vpop.permute.xlu0 %87
    %89 = vrot.lane.b32.xlu0 %v42, 3
    %v90 = vpop.permute.xlu0 %89
    %vm107 = vcmask 23552
    %v108 = vsel %vm107, 0.0, %v60
    %v109 = vsel %vm107, 0.0, %v62
    %v110 = vsel %vm107, 0.0, %v64
    %v111 = vsel %vm107, 0.0, %v66
    %v112 = vsel %vm107, 0.0, %v68
    %v113 = vsel %vm107, 0.0, %v70
    %v114 = vsel %vm107, 0.0, %v72
    %v115 = vsel %vm107, 0.0, %v74
    %v116 = vsel %vm107, 0.0, %v76
    %v117 = vsel %vm107, 0.0, %v78
    %v118 = vsel %vm107, 0.0, %v80
    %v119 = vsel %vm107, 0.0, %v82
    %v120 = vsel %vm107, 0.0, %v84
    %v121 = vsel %vm107, 0.0, %v86
    %v122 = vsel %vm107, 0.0, %v88
    %v123 = vsel %vm107, 0.0, %v90
    %vm124 = vcmask 105472
    %v125 = vsel %vm124, %v108, 0.0
    %v126 = vsel %vm124, %v109, 0.0
    %v127 = vsel %vm124, %v110, 0.0
    %v128 = vsel %vm124, %v111, 0.0
    %v129 = vsel %vm124, %v112, 0.0
    %v130 = vsel %vm124, %v113, 0.0
    %v131 = vsel %vm124, %v114, 0.0
    %v132 = vsel %vm124, %v115, 0.0
    %v133 = vsel %vm124, %v116, 0.0
    %v134 = vsel %vm124, %v117, 0.0
    %v135 = vsel %vm124, %v118, 0.0
    %v136 = vsel %vm124, %v119, 0.0
    %v137 = vsel %vm124, %v120, 0.0
    %v138 = vsel %vm124, %v121, 0.0
    %v139 = vsel %vm124, %v122, 0.0
    %v140 = vsel %vm124, %v123, 0.0
    %vm141 = vcmask 130048
    %142 = vst.msk [vmem:[#allocation2 + $0x1] sm:$0xff] %vm141, %v125
    %vm143 = vcmask 126976
    %144 = vst.msk [vmem:[#allocation2 + $0x9] sm:$0x1f] %vm143, %v126
    %145 = vst.msk [vmem:[#allocation2 + $0x11] sm:$0xff] %vm141, %v127
    %146 = vst.msk [vmem:[#allocation2 + $0x19] sm:$0x1f] %vm143, %v128
    %147 = vst.msk [vmem:[#allocation2 + $0x21] sm:$0xff] %vm141, %v129
    %148 = vst.msk [vmem:[#allocation2 + $0x29] sm:$0x1f] %vm143, %v130
    %149 = vst.msk [vmem:[#allocation2 + $0x31] sm:$0xff] %vm141, %v131
    %150 = vst.msk [vmem:[#allocation2 + $0x39] sm:$0x1f] %vm143, %v132
    %151 = vst.msk [vmem:[#allocation2 + $0x41] sm:$0xff] %vm141, %v133
    %152 = vst.msk [vmem:[#allocation2 + $0x49] sm:$0x1f] %vm143, %v134
    %153 = vst.msk [vmem:[#allocation2 + $0x51] sm:$0xff] %vm141, %v135
    %154 = vst.msk [vmem:[#allocation2 + $0x59] sm:$0x1f] %vm143, %v136
    %155 = vst.msk [vmem:[#allocation2 + $0x61] sm:$0xff] %vm141, %v137
    %156 = vst.msk [vmem:[#allocation2 + $0x69] sm:$0x1f] %vm143, %v138
    %157 = vst.msk [vmem:[#allocation2 + $0x71] sm:$0xff] %vm141, %v139
    %158 = vst.msk [vmem:[#allocation2 + $0x79] sm:$0x1f] %vm143, %v140
    // Predicated region
    $region6: #{tpu_custom_call.1} parent=1 // pred_check
      _
    $region7: #{tpu_custom_call.1} parent=1 // pred_check_branch
      %160 = sbr.rel (0) target = $region9
    $region8: #{tpu_custom_call.1} parent=1 // pred_region
      %s162 = ssub.s32 2048, 2048
      %163 = vsyncadd [#allocation3], %s162
      %s164 = sshll.u32 [#allocation2], 4
      %s165 = int_to_ptr.vmem [resolvable:$true] %s164
      %170 = dma.vmem_to_hbm [thread:$0]  %s165, 2048, %s1, [#allocation3], 128, 128, 8
    $region9: #{tpu_custom_call.1} parent=1 // pred_fallthru
      _
    // Predicated region
    $region10: #{tpu_custom_call.1} parent=1 // pred_check
      _
    $region11: #{tpu_custom_call.1} parent=1 // pred_check_branch
      %172 = sbr.rel (0) target = $region13
    $region12: #{tpu_custom_call.1} parent=1 // pred_region
      %173 = dma.done [#allocation3], 2048
    $region13: #{tpu_custom_call.1} parent=1 // pred_fallthru
      _
    %174 = vsyncpa [#allocation3], 1

// kernel: tpu_custom_call.1
$region0: #{tpu_custom_call.1}
  #allocation0 [shape = 'u32[]', space=smem, size = 0x4, offset = 0x4, fixed_abs, tag = 'smem constant byte address 0x4 - core index']
  #allocation1 [shape = 'u32[144,128]{1,0:T(1,128)}', space=vmem, size = 0x12000, scoped, tag = 'internal scratch']
  %s0 = inlined_call_operand.vmem [shape: f32[8,13,10], index: 0, kind: input, shape index: {}]
  %s1 = inlined_call_operand.hbm [shape: f32[8,16,16], index: 1, kind: output, shape index: {}]
  %s2 = sld [smem:[#allocation0]]
  $region14: #{tpu_custom_call.1} parent=0
    _
  %s4 = ssub.s32 1, %s2
  %s5 = scalar_select 0, %s4, %s2
  $region1: #{tpu_custom_call.1} parent=0
    #allocation2 [shape = 'u8[65536]{0}', space=vmem, size = 0x10000, scoped, tag = 'output window, operand 0, single buffered']
    #allocation3 [shape = 's32[1]{0}', space=sflag, size = 0x4, scoped, tag = 'scoped memory for tpu_custom_call.1']
    %6 = vsyncpa [#allocation3], 0
    // Predicated region
    $region2: #{tpu_custom_call.1} parent=1 // pred_check
      _
    $region3: #{tpu_custom_call.1} parent=1 // pred_check_branch
      %8 = sbr.rel (0) target = $region5
    $region4: #{tpu_custom_call.1} parent=1 // pred_region
      _
    $region5: #{tpu_custom_call.1} parent=1 // pred_fallthru
      _
    %vm9 = vcmask 122880
    %10 = vst.msk [vmem:[#allocation2] sm:$0x1] %vm9, 0.0
    %11 = vst.msk [vmem:[#allocation2 + $0x10] sm:$0x1] %vm9, 0.0
    %12 = vst.msk [vmem:[#allocation2 + $0x20] sm:$0x1] %vm9, 0.0
    %13 = vst.msk [vmem:[#allocation2 + $0x30] sm:$0x1] %vm9, 0.0
    %14 = vst.msk [vmem:[#allocation2 + $0x40] sm:$0x1] %vm9, 0.0
    %15 = vst.msk [vmem:[#allocation2 + $0x50] sm:$0x1] %vm9, 0.0
    %16 = vst.msk [vmem:[#allocation2 + $0x60] sm:$0x1] %vm9, 0.0
    %17 = vst.msk [vmem:[#allocation2 + $0x70] sm:$0x1] %vm9, 0.0
    %vm18 = vcmask 123904
    %19 = vst.msk [vmem:[#allocation2 + $0xe] sm:$0x3] %vm18, 0.0
    %20 = vst.msk [vmem:[#allocation2 + $0x1e] sm:$0x3] %vm18, 0.0
    %21 = vst.msk [vmem:[#allocation2 + $0x2e] sm:$0x3] %vm18, 0.0
    %22 = vst.msk [vmem:[#allocation2 + $0x3e] sm:$0x3] %vm18, 0.0
    %23 = vst.msk [vmem:[#allocation2 + $0x4e] sm:$0x3] %vm18, 0.0
    %24 = vst.msk [vmem:[#allocation2 + $0x5e] sm:$0x3] %vm18, 0.0
    %25 = vst.msk [vmem:[#allocation2 + $0x6e] sm:$0x3] %vm18, 0.0
    %26 = vst.msk [vmem:[#allocation2 + $0x7e] sm:$0x3] %vm18, 0.0
    %vm27 = vcmask 23552
    %28 = vst.msk [vmem:[#allocation2 + $0x1] sm:$0xff] %vm27, 0.0
    %vm29 = vcmask 20480
    %30 = vst.msk [vmem:[#allocation2 + $0x9] sm:$0x1f] %vm29, 0.0
    %31 = vst.msk [vmem:[#allocation2 + $0x11] sm:$0xff] %vm27, 0.0
    %32 = vst.msk [vmem:[#allocation2 + $0x19] sm:$0x1f] %vm29, 0.0
    %33 = vst.msk [vmem:[#allocation2 + $0x21] sm:$0xff] %vm27, 0.0
    %34 = vst.msk [vmem:[#allocation2 + $0x29] sm:$0x1f] %vm29, 0.0
    %35 = vst.msk [vmem:[#allocation2 + $0x31] sm:$0xff] %vm27, 0.0
    %36 = vst.msk [vmem:[#allocation2 + $0x39] sm:$0x1f] %vm29, 0.0
    %37 = vst.msk [vmem:[#allocation2 + $0x41] sm:$0xff] %vm27, 0.0
    %38 = vst.msk [vmem:[#allocation2 + $0x49] sm:$0x1f] %vm29, 0.0
    %39 = vst.msk [vmem:[#allocation2 + $0x51] sm:$0xff] %vm27, 0.0
    %40 = vst.msk [vmem:[#allocation2 + $0x59] sm:$0x1f] %vm29, 0.0
    %41 = vst.msk [vmem:[#allocation2 + $0x61] sm:$0xff] %vm27, 0.0
    %42 = vst.msk [vmem:[#allocation2 + $0x69] sm:$0x1f] %vm29, 0.0
    %43 = vst.msk [vmem:[#allocation2 + $0x71] sm:$0xff] %vm27, 0.0
    %44 = vst.msk [vmem:[#allocation2 + $0x79] sm:$0x1f] %vm29, 0.0
    %vm45 = vcmask 130152
    %46 = vst.msk [vmem:[#allocation2 + $0x1] sm:$0xff] %vm45, 0.0
    %vm47 = vcmask 127080
    %48 = vst.msk [vmem:[#allocation2 + $0x9] sm:$0x1f] %vm47, 0.0
    %49 = vst.msk [vmem:[#allocation2 + $0x11] sm:$0xff] %vm45, 0.0
    %50 = vst.msk [vmem:[#allocation2 + $0x19] sm:$0x1f] %vm47, 0.0
    %51 = vst.msk [vmem:[#allocation2 + $0x21] sm:$0xff] %vm45, 0.0
    %52 = vst.msk [vmem:[#allocation2 + $0x29] sm:$0x1f] %vm47, 0.0
    %53 = vst.msk [vmem:[#allocation2 + $0x31] sm:$0xff] %vm45, 0.0
    %54 = vst.msk [vmem:[#allocation2 + $0x39] sm:$0x1f] %vm47, 0.0
    %55 = vst.msk [vmem:[#allocation2 + $0x41] sm:$0xff] %vm45, 0.0
    %56 = vst.msk [vmem:[#allocation2 + $0x49] sm:$0x1f] %vm47, 0.0
    %57 = vst.msk [vmem:[#allocation2 + $0x51] sm:$0xff] %vm45, 0.0
    %58 = vst.msk [vmem:[#allocation2 + $0x59] sm:$0x1f] %vm47, 0.0
    %59 = vst.msk [vmem:[#allocation2 + $0x61] sm:$0xff] %vm45, 0.0
    %60 = vst.msk [vmem:[#allocation2 + $0x69] sm:$0x1f] %vm47, 0.0
    %61 = vst.msk [vmem:[#allocation2 + $0x71] sm:$0xff] %vm45, 0.0
    %62 = vst.msk [vmem:[#allocation2 + $0x79] sm:$0x1f] %vm47, 0.0
    %v63 = vld [vmem:[%s0] sm:$0xff]
    %v64 = vld [vmem:[%s0 + $0x8] sm:$0x1f]
    %v65 = vld [vmem:[%s0 + $0x10] sm:$0xff]
    %v66 = vld [vmem:[%s0 + $0x18] sm:$0x1f]
    %v67 = vld [vmem:[%s0 + $0x20] sm:$0xff]
    %v68 = vld [vmem:[%s0 + $0x28] sm:$0x1f]
    %v69 = vld [vmem:[%s0 + $0x30] sm:$0xff]
    %v70 = vld [vmem:[%s0 + $0x38] sm:$0x1f]
    %v71 = vld [vmem:[%s0 + $0x40] sm:$0xff]
    %v72 = vld [vmem:[%s0 + $0x48] sm:$0x1f]
    %v73 = vld [vmem:[%s0 + $0x50] sm:$0xff]
    %v74 = vld [vmem:[%s0 + $0x58] sm:$0x1f]
    %v75 = vld [vmem:[%s0 + $0x60] sm:$0xff]
    %v76 = vld [vmem:[%s0 + $0x68] sm:$0x1f]
    %v77 = vld [vmem:[%s0 + $0x70] sm:$0xff]
    %v78 = vld [vmem:[%s0 + $0x78] sm:$0x1f]
    %95 = vrot.lane.b32.xlu0 %v63, 3
    %v96 = vpop.permute.xlu0 %95
    %97 = vrot.lane.b32.xlu0 %v64, 3
    %v98 = vpop.permute.xlu0 %97
    %99 = vrot.lane.b32.xlu0 %v65, 3
    %v100 = vpop.permute.xlu0 %99
    %101 = vrot.lane.b32.xlu0 %v66, 3
    %v102 = vpop.permute.xlu0 %101
    %103 = vrot.lane.b32.xlu0 %v67, 3
    %v104 = vpop.permute.xlu0 %103
    %105 = vrot.lane.b32.xlu0 %v68, 3
    %v106 = vpop.permute.xlu0 %105
    %107 = vrot.lane.b32.xlu0 %v69, 3
    %v108 = vpop.permute.xlu0 %107
    %109 = vrot.lane.b32.xlu0 %v70, 3
    %v110 = vpop.permute.xlu0 %109
    %111 = vrot.lane.b32.xlu0 %v71, 3
    %v112 = vpop.permute.xlu0 %111
    %113 = vrot.lane.b32.xlu0 %v72, 3
    %v114 = vpop.permute.xlu0 %113
    %115 = vrot.lane.b32.xlu0 %v73, 3
    %v116 = vpop.permute.xlu0 %115
    %117 = vrot.lane.b32.xlu0 %v74, 3
    %v118 = vpop.permute.xlu0 %117
    %119 = vrot.lane.b32.xlu0 %v75, 3
    %v120 = vpop.permute.xlu0 %119
    %121 = vrot.lane.b32.xlu0 %v76, 3
    %v122 = vpop.permute.xlu0 %121
    %123 = vrot.lane.b32.xlu0 %v77, 3
    %v124 = vpop.permute.xlu0 %123
    %125 = vrot.lane.b32.xlu0 %v78, 3
    %v126 = vpop.permute.xlu0 %125
    %vm143 = vcmask 105496
    %144 = vst.msk [vmem:[#allocation2 + $0x1] sm:$0xff] %vm143, %v96
    %vm145 = vcmask 102424
    %146 = vst.msk [vmem:[#allocation2 + $0x9] sm:$0x1f] %vm145, %v98
    %147 = vst.msk [vmem:[#allocation2 + $0x11] sm:$0xff] %vm143, %v100
    %148 = vst.msk [vmem:[#allocation2 + $0x19] sm:$0x1f] %vm145, %v102
    %149 = vst.msk [vmem:[#allocation2 + $0x21] sm:$0xff] %vm143, %v104
    %150 = vst.msk [vmem:[#allocation2 + $0x29] sm:$0x1f] %vm145, %v106
    %151 = vst.msk [vmem:[#allocation2 + $0x31] sm:$0xff] %vm143, %v108
    %152 = vst.msk [vmem:[#allocation2 + $0x39] sm:$0x1f] %vm145, %v110
    %153 = vst.msk [vmem:[#allocation2 + $0x41] sm:$0xff] %vm143, %v112
    %154 = vst.msk [vmem:[#allocation2 + $0x49] sm:$0x1f] %vm145, %v114
    %155 = vst.msk [vmem:[#allocation2 + $0x51] sm:$0xff] %vm143, %v116
    %156 = vst.msk [vmem:[#allocation2 + $0x59] sm:$0x1f] %vm145, %v118
    %157 = vst.msk [vmem:[#allocation2 + $0x61] sm:$0xff] %vm143, %v120
    %158 = vst.msk [vmem:[#allocation2 + $0x69] sm:$0x1f] %vm145, %v122
    %159 = vst.msk [vmem:[#allocation2 + $0x71] sm:$0xff] %vm143, %v124
    %160 = vst.msk [vmem:[#allocation2 + $0x79] sm:$0x1f] %vm145, %v126
    // Predicated region
    $region6: #{tpu_custom_call.1} parent=1 // pred_check
      _
    $region7: #{tpu_custom_call.1} parent=1 // pred_check_branch
      %162 = sbr.rel (0) target = $region9
    $region8: #{tpu_custom_call.1} parent=1 // pred_region
      %s164 = ssub.s32 2048, 2048
      %165 = vsyncadd [#allocation3], %s164
      %s166 = sshll.u32 [#allocation2], 4
      %s167 = int_to_ptr.vmem [resolvable:$true] %s166
      %172 = dma.vmem_to_hbm [thread:$0]  %s167, 2048, %s1, [#allocation3], 128, 128, 8
    $region9: #{tpu_custom_call.1} parent=1 // pred_fallthru
      _
    // Predicated region
    $region10: #{tpu_custom_call.1} parent=1 // pred_check
      _
    $region11: #{tpu_custom_call.1} parent=1 // pred_check_branch
      %174 = sbr.rel (0) target = $region13
    $region12: #{tpu_custom_call.1} parent=1 // pred_region
      %175 = dma.done [#allocation3], 2048
    $region13: #{tpu_custom_call.1} parent=1 // pred_fallthru
      _
    %176 = vsyncpa [#allocation3], 1

</llo_original>
